<compile_context>
chip_gen: v7x
topology: tpu7x:2x2x1
jax: 0.10.0
libtpu: 0.0.40
codegen_flags: <defaults>
</compile_context>

<pallas_src>
import functools
import math

import jax
import jax.numpy as jnp
from jax.experimental import pallas as pl
from jax.experimental.pallas import tpu as pltpu

LANE = 128  # lane width (last-dim tiling)


def _round_up(x, m):
    return ((x + m - 1) // m) * m


def _graph_conv_kernel(a_ref, x_ref, w_ref, o_ref, *,
                       K, adj_sq, scale_identity, f_in_p, ew_bf16):
    rel = pl.program_id(1)
    ew_dtype = jnp.bfloat16 if ew_bf16 else jnp.float32

    A_in = a_ref[0, 0]                                   # (Np, Np) bf16
    Np = A_in.shape[0]

    # ---- laplacian_batch (eye-free) -----------------------------------------
    if adj_sq:
        # bf16 MXU operands; products of the bf16-rounded A are exact in the
        # f32 accumulator, so this matches an f32 matmul of the same values.
        A_work = jnp.dot(A_in, A_in, preferred_element_type=jnp.float32)
    else:
        A_work = A_in

    # Degree vector (torch: column sums of A_hat) in both orientations, without
    # materializing eye/iota or a vector transpose:
    #   (1, Np): sublane reduce in f32;  (Np, 1): TN matmul with ones (MXU).
    A_f32 = A_work.astype(jnp.float32)
    deg_row = jnp.sum(A_f32, axis=0, keepdims=True)                       # (1, Np)
    ones_col = jnp.ones((Np, 1), dtype=jnp.float32)
    deg_col = jax.lax.dot_general(A_f32, ones_col,
                                  (((0,), (0,)), ((), ())),
                                  preferred_element_type=jnp.float32)     # (Np, 1)

    # Identity is only added when K < 2 in the reference.  Fold it in
    # algebraically: A_hat = A + c*I  =>  deg += c,  L_full = D A D + c*D^2.
    c = 2.0 if scale_identity else 1.0
    if K < 2:
        deg_row = deg_row + c
        deg_col = deg_col + c
    d_row = jax.lax.rsqrt(deg_row + 1e-5)                                 # (1, Np) f32
    d_col = jax.lax.rsqrt(deg_col + 1e-5)                                 # (Np, 1) f32

    # Elementwise Laplacian chain: bf16 on chips with native bf16 VALUs.
    if not ew_bf16:
        A_ew = A_f32
    elif A_work.dtype == jnp.bfloat16:
        A_ew = A_work
    else:
        A_ew = A_work.astype(jnp.bfloat16)
    L_bf = ((d_col.astype(ew_dtype) * A_ew) * d_row.astype(ew_dtype)
            ).astype(jnp.bfloat16)                                        # D A D

    # ---- chebyshev_basis fused with the 1x1 conv -----------------------------
    X_bf = x_ref[0]                                      # (Np, F_in_p) bf16
    W = w_ref[0]                                         # (K*F_in_p, F_out_p) bf16
    f_out_p = W.shape[1]

    def wslice(k):                                       # static sublane slice
        return W[k * f_in_p:(k + 1) * f_in_p, :]

    if K == 1:
        # L_full @ X = (D A D) @ X + c * D^2 * X.  Choose the association so the
        # dominant O(N^2 * F) MXU term uses the smaller feature width.
        idc = (c * d_col) * d_col                                         # (Np, 1) f32
        if f_out_p < f_in_p:
            xw = jnp.dot(X_bf, wslice(0), preferred_element_type=jnp.float32)
            contrib = (jnp.dot(L_bf, xw.astype(jnp.bfloat16),
                               preferred_element_type=jnp.float32)
                       + idc * xw)
        else:
            xt = (jnp.dot(L_bf, X_bf, preferred_element_type=jnp.float32)
                  + idc * X_bf.astype(jnp.float32))
            contrib = jnp.dot(xt.astype(jnp.bfloat16), wslice(0),
                              preferred_element_type=jnp.float32)
    else:
        xt_prev = X_bf.astype(jnp.float32)                                # T_0
        xt_cur = jnp.dot(L_bf, X_bf, preferred_element_type=jnp.float32)  # T_1
        xt_cur_bf = xt_cur.astype(jnp.bfloat16)
        contrib = (jnp.dot(X_bf, wslice(0), preferred_element_type=jnp.float32)
                   + jnp.dot(xt_cur_bf, wslice(1),
                             preferred_element_type=jnp.float32))
        for k in range(2, K):
            xt_new = (2.0 * jnp.dot(L_bf, xt_cur_bf,
                                    preferred_element_type=jnp.float32)
                      - xt_prev)
            xt_new_bf = xt_new.astype(jnp.bfloat16)
            contrib = contrib + jnp.dot(xt_new_bf, wslice(k),
                                        preferred_element_type=jnp.float32)
            xt_prev, xt_cur, xt_cur_bf = xt_cur, xt_new, xt_new_bf

    # Accumulate straight into the resident f32 output block (its block index
    # is constant over the relation axis): no scratch, no zero-init pass, and
    # HBM writeback only happens when the batch index changes.
    @pl.when(rel == 0)
    def _first():
        o_ref[0] = contrib

    @pl.when(rel > 0)
    def _accum():
        o_ref[0] = o_ref[0] + contrib


def graph_conv_pallas(x, A, weight, *, K=1, n_relations=1,
                      adj_sq=False, scale_identity=False):
    """x: (B, F_in, N); A: (B, N, N) or (B, N, N, n_relations);
    weight: (F_out, F_in*K*n_relations)  (Conv1d kernel_size=1, bias=False).
    Returns (B, F_out, N), matching the PyTorch module."""
    B, F_in, N = x.shape
    if A.ndim == 3:
        A = A[..., None]
    assert A.shape == (B, N, N, n_relations), A.shape
    F_out = weight.shape[0]
    assert weight.shape[1] == F_in * K * n_relations, weight.shape

    # Lane-dense padding: features AND nodes padded to multiples of 128 so both
    # the lane and the contraction axes are unmasked (full vregs, full MXU
    # feeds).  Zero padding is exact: padded X rows / W rows+cols are zero and
    # padded outputs are sliced off below.
    F_in_p = _round_up(F_in, LANE)
    F_out_p = _round_up(F_out, LANE)
    N_p = _round_up(N, LANE)

    kind = jax.devices()[0].device_kind.lower()
    # bf16 elementwise only where the VPU executes bf16 natively (v6e+).
    ew_bf16 = not any(v in kind for v in ("v2", "v3", "v4", "v5"))
    is_v7 = ("v7" in kind) or ("tpu7" in kind)
    phys_vmem = (64 << 20) if is_v7 else (128 << 20)

    # Node-major features; bf16 operands => half the DMA bytes, full-rate MXU.
    # Note: degrees/Laplacian are computed from the bf16-rounded adjacency;
    # validate tolerance at realistic graph sizes if tighter accuracy matters.
    x_t = jnp.transpose(x, (0, 2, 1))                                # (B, N, F_in)
    x_t = jnp.pad(x_t, ((0, 0), (0, N_p - N), (0, F_in_p - F_in)))
    x_t = x_t.astype(jnp.bfloat16)

    A_t = jnp.transpose(A, (0, 3, 1, 2))                             # (B, n_rel, N, N)
    A_t = jnp.pad(A_t, ((0, 0), (0, 0), (0, N_p - N), (0, N_p - N)))
    A_t = A_t.astype(jnp.bfloat16)

    # Conv1d weight (F_out, n_rel*K*F_in) -> (n_rel, K*F_in_p, F_out_p),
    # zero-padded per k-block so rows line up with the padded feature columns.
    w4 = weight.reshape(F_out, n_relations, K, F_in)
    w4 = jnp.pad(w4, ((0, F_out_p - F_out), (0, 0), (0, 0), (0, F_in_p - F_in)))
    w_t = jnp.transpose(w4, (1, 2, 3, 0)).reshape(n_relations, K * F_in_p, F_out_p)
    w_t = w_t.astype(jnp.bfloat16)

    # VMEM budget: double-buffered pipeline blocks + in-kernel N^2 / N*F
    # temporaries.  Fail loudly rather than silently clamping past physical VMEM.
    blk = (2 * N_p * N_p * 2                     # A blocks (bf16)
           + 2 * N_p * F_in_p * 2                # X blocks (bf16)
           + 2 * K * F_in_p * F_out_p * 2        # per-relation W blocks (bf16)
           + 2 * N_p * F_out_p * 4)              # output blocks (f32)
    tmp_nn = N_p * N_p * ((4 if adj_sq else 0)   # A@A (f32)
                          + 4                    # f32 copy of A for the degree
                          + (2 if ew_bf16 else 6))   # L (+ f32 intermediate)
    tmp_nf = ((3 * N_p * F_in_p * 6) if K > 1
              else (N_p * max(F_in_p, F_out_p) * 6))
    vmem_needed = blk + tmp_nn + tmp_nf + N_p * F_out_p * 4 + (4 << 20)
    vmem_cap = phys_vmem - (8 << 20)
    if vmem_needed > vmem_cap:
        # TODO(synk): node-row tiled variant (K==1) / two-pass variant (K>1).
        raise ValueError(
            f"GraphConv Pallas kernel needs ~{vmem_needed >> 20} MiB VMEM but only "
            f"~{vmem_cap >> 20} MiB is available on this chip ({kind}); N is too "
            "large for whole-(N,N) VMEM residency.")
    vmem_limit = int(min(max(vmem_needed, 32 << 20), vmem_cap))

    kernel = functools.partial(_graph_conv_kernel, K=K, adj_sq=adj_sq,
                               scale_identity=scale_identity,
                               f_in_p=F_in_p, ew_bf16=ew_bf16)

    out = pl.pallas_call(
        kernel,
        out_shape=jax.ShapeDtypeStruct((B, N_p, F_out_p), jnp.float32),
        grid_spec=pltpu.PrefetchScalarGridSpec(
            num_scalar_prefetch=0,
            grid=(B, n_relations),
            in_specs=[
                pl.BlockSpec((1, 1, N_p, N_p), lambda b, r: (b, r, 0, 0)),
                pl.BlockSpec((1, N_p, F_in_p), lambda b, r: (b, 0, 0)),
                # Per-relation weight slice: 1/n_rel the residency, and the next
                # relation's weight DMA overlaps the current relation's matmuls.
                pl.BlockSpec((1, K * F_in_p, F_out_p), lambda b, r: (r, 0, 0)),
            ],
            out_specs=pl.BlockSpec((1, N_p, F_out_p), lambda b, r: (b, 0, 0)),
        ),
        compiler_params=pltpu.CompilerParams(
            dimension_semantics=("parallel", "arbitrary"),
            vmem_limit_bytes=vmem_limit),
    )(A_t, x_t, w_t)

    return jnp.transpose(out[:, :N, :F_out], (0, 2, 1))             # (B, F_out, N)


def graph_conv_ref(x, A, weight, K, n_relations, adj_sq, scale_identity):
    """Pure-JAX f32 reference mirroring the PyTorch module exactly."""
    B, F_in, N = x.shape
    xT = jnp.transpose(x, (0, 2, 1))
    x_hat = []
    for rel in range(n_relations):
        Ar = A[..., rel]
        if adj_sq:
            Ar = jnp.einsum('bij,bjk->bik', Ar, Ar)
        A_hat = Ar
        if K < 2 or scale_identity:
            I = jnp.eye(N, dtype=jnp.float32)
            if scale_identity:
                I = 2.0 * I
            if K < 2:
                A_hat = Ar + I
        d = (jnp.sum(A_hat, axis=1) + 1e-5) ** (-0.5)
        L = d[:, :, None] * A_hat * d[:, None, :]
        if K == 1:
            Xt = jnp.einsum('bij,bjf->bif', L, xT)
        else:
            Xts = [xT, jnp.einsum('bij,bjf->bif', L, xT)]
            for _ in range(2, K):
                Xts.append(2.0 * jnp.einsum('bij,bjf->bif', L, Xts[-1]) - Xts[-2])
            Xt = jnp.concatenate(Xts, axis=2)
        x_hat.append(Xt)
    xcat = jnp.concatenate(x_hat, axis=2)                            # (B, N, C_in)
    return jnp.einsum('bnc,oc->bon', xcat, weight)                   # (B, F_out, N)


def _run_case(key, *, B, F_in, F_out, N, K, n_rel, adj_sq, scale_identity):
    kx, ka, kw = jax.random.split(key, 3)
    x = jax.random.normal(kx, (B, F_in, N), jnp.float32)
    A_raw = jax.random.uniform(ka, (B, N, N, n_rel), jnp.float32)
    A = 0.5 * (A_raw + jnp.transpose(A_raw, (0, 2, 1, 3)))           # symmetric adjacency
    fan_in = F_in * K * n_rel
    bound = 1.0 / math.sqrt(fan_in)                                  # Conv1d-style init
    w = jax.random.uniform(kw, (F_out, fan_in), jnp.float32, -bound, bound)

    y = graph_conv_pallas(x, A, w, K=K, n_relations=n_rel,
                          adj_sq=adj_sq, scale_identity=scale_identity)
    y = jax.block_until_ready(y)

    y_ref = graph_conv_ref(x, A, w, K, n_rel, adj_sq, scale_identity)
    assert y.shape == (B, F_out, N), y.shape
    # Tolerance reflects bf16 MXU operands (f32 accumulation) vs f32 reference.
    err = float(jnp.max(jnp.abs(y - y_ref)))
    assert jnp.allclose(y, y_ref, rtol=5e-2, atol=5e-2), err


if __name__ == "__main__":
    key = jax.random.PRNGKey(0)
    k1, k2 = jax.random.split(key)
    # Default GraphConv (Kipf & Welling GCN): K=1, single relation.
    _run_case(k1, B=2, F_in=8, F_out=16, N=16, K=1, n_rel=1,
              adj_sq=False, scale_identity=False)
    # Chebyshev path with multiple relations + adjacency tricks.
    _run_case(k2, B=2, F_in=8, F_out=16, N=16, K=3, n_rel=2,
              adj_sq=True, scale_identity=True)
    print("KERNEL_OK")
</pallas_src>

<mosaic_0001>
module attributes {stable_mosaic.version = 11 : i64} {
  func.func @_graph_conv_kernel(%arg0: i32, %arg1: i32, %arg2: memref<1x1x128x128xbf16, #tpu.memory_space<vmem>>, %arg3: memref<1x128x128xbf16, #tpu.memory_space<vmem>>, %arg4: memref<1x128x128xbf16, #tpu.memory_space<vmem>>, %arg5: memref<1x128x128xf32, #tpu.memory_space<vmem>>) attributes {dimension_semantics = [#tpu.dimension_semantics<parallel>, #tpu.dimension_semantics<arbitrary>], iteration_bounds = array<i64: 2, 1>, scalar_prefetch = 0 : i64, scratch_operands = 0 : i64, tpu.core_type = #tpu.core_type<tc>, window_params = [{transform_indices = @transform_0, window_bounds = array<i64: 1, 1, 128, 128>}, {transform_indices = @transform_1, window_bounds = array<i64: 1, 128, 128>}, {transform_indices = @transform_2, window_bounds = array<i64: 1, 128, 128>}, {transform_indices = @transform_3, window_bounds = array<i64: 1, 128, 128>}]} {
    %c0 = arith.constant 0 : index
    %c0_0 = arith.constant 0 : index
    %c0_1 = arith.constant 0 : index
    %c0_2 = arith.constant 0 : index
    %0 = vector.load %arg2[%c0, %c0_0, %c0_1, %c0_2] : memref<1x1x128x128xbf16, #tpu.memory_space<vmem>>, vector<1x1x128x128xbf16>
    %1 = vector.shape_cast %0 : vector<1x1x128x128xbf16> to vector<128x128xbf16>
    %2 = arith.extf %1 : vector<128x128xbf16> to vector<128x128xf32>
    %cst = arith.constant dense<0.000000e+00> : vector<128xf32>
    %3 = vector.multi_reduction <add>, %2, %cst [0] : vector<128x128xf32> to vector<128xf32>
    %4 = vector.shape_cast %3 : vector<128xf32> to vector<1x128xf32>
    %cst_3 = arith.constant 1.000000e+00 : f32
    %5 = vector.broadcast %cst_3 : f32 to vector<128x1xf32>
    %cst_4 = arith.constant dense<0.000000e+00> : vector<128x1xf32>
    %6 = tpu.matmul %2, %5, %cst_4 {dimension_numbers = #tpu.dot_dimension_numbers<[0], [0], [1], [1], [0, 1, 1, 1], [], []>} : vector<128x128xf32>, vector<128x1xf32>, vector<128x1xf32> -> vector<128x1xf32>
    %cst_5 = arith.constant 1.000000e+00 : f32
    %7 = vector.broadcast %cst_5 : f32 to vector<1x128xf32>
    %8 = arith.addf %4, %7 : vector<1x128xf32>
    %cst_6 = arith.constant 1.000000e+00 : f32
    %9 = vector.broadcast %cst_6 : f32 to vector<128x1xf32>
    %10 = arith.addf %6, %9 : vector<128x1xf32>
    %cst_7 = arith.constant 9.99999974E-6 : f32
    %11 = vector.broadcast %cst_7 : f32 to vector<1x128xf32>
    %12 = arith.addf %8, %11 : vector<1x128xf32>
    %13 = math.rsqrt %12 : vector<1x128xf32>
    %cst_8 = arith.constant 9.99999974E-6 : f32
    %14 = vector.broadcast %cst_8 : f32 to vector<128x1xf32>
    %15 = arith.addf %10, %14 : vector<128x1xf32>
    %16 = math.rsqrt %15 : vector<128x1xf32>
    %17 = arith.truncf %16 : vector<128x1xf32> to vector<128x1xbf16>
    %18 = vector.broadcast %17 : vector<128x1xbf16> to vector<128x128xbf16>
    %19 = arith.mulf %18, %1 : vector<128x128xbf16>
    %20 = arith.truncf %13 : vector<1x128xf32> to vector<1x128xbf16>
    %21 = vector.broadcast %20 : vector<1x128xbf16> to vector<128x128xbf16>
    %22 = arith.mulf %19, %21 : vector<128x128xbf16>
    %c0_9 = arith.constant 0 : index
    %c0_10 = arith.constant 0 : index
    %c0_11 = arith.constant 0 : index
    %23 = vector.load %arg3[%c0_9, %c0_10, %c0_11] : memref<1x128x128xbf16, #tpu.memory_space<vmem>>, vector<1x128x128xbf16>
    %24 = vector.shape_cast %23 : vector<1x128x128xbf16> to vector<128x128xbf16>
    %c0_12 = arith.constant 0 : index
    %c0_13 = arith.constant 0 : index
    %c0_14 = arith.constant 0 : index
    %25 = vector.load %arg4[%c0_12, %c0_13, %c0_14] : memref<1x128x128xbf16, #tpu.memory_space<vmem>>, vector<1x128x128xbf16>
    %26 = vector.shape_cast %25 : vector<1x128x128xbf16> to vector<128x128xbf16>
    %cst_15 = arith.constant 1.000000e+00 : f32
    %27 = vector.broadcast %cst_15 : f32 to vector<128x1xf32>
    %28 = arith.mulf %27, %16 : vector<128x1xf32>
    %29 = arith.mulf %28, %16 : vector<128x1xf32>
    %cst_16 = arith.constant dense<0.000000e+00> : vector<128x128xf32>
    %30 = tpu.matmul %22, %24, %cst_16 {dimension_numbers = #tpu.dot_dimension_numbers<[1], [0], [0], [1], [0, 0, 1, 1], [], []>} : vector<128x128xbf16>, vector<128x128xbf16>, vector<128x128xf32> -> vector<128x128xf32>
    %31 = arith.extf %24 : vector<128x128xbf16> to vector<128x128xf32>
    %32 = vector.broadcast %29 : vector<128x1xf32> to vector<128x128xf32>
    %33 = arith.mulf %32, %31 : vector<128x128xf32>
    %34 = arith.addf %30, %33 : vector<128x128xf32>
    %35 = arith.truncf %34 : vector<128x128xf32> to vector<128x128xbf16>
    %cst_17 = arith.constant dense<0.000000e+00> : vector<128x128xf32>
    %36 = tpu.matmul %35, %26, %cst_17 {dimension_numbers = #tpu.dot_dimension_numbers<[1], [0], [0], [1], [0, 0, 1, 1], [], []>} : vector<128x128xbf16>, vector<128x128xbf16>, vector<128x128xf32> -> vector<128x128xf32>
    %c0_i32 = arith.constant 0 : i32
    %37 = arith.cmpi eq, %arg1, %c0_i32 : i32
    %38 = arith.extui %37 : i1 to i32
    %c0_i32_18 = arith.constant 0 : i32
    %39 = arith.cmpi ne, %38, %c0_i32_18 : i32
    scf.if %39 {
      %c0_21 = arith.constant 0 : index
      %c0_22 = arith.constant 0 : index
      %c0_23 = arith.constant 0 : index
      %43 = vector.load %arg5[%c0_21, %c0_22, %c0_23] : memref<1x128x128xf32, #tpu.memory_space<vmem>>, vector<1x128x128xf32>
      %44 = vector.shape_cast %43 : vector<1x128x128xf32> to vector<128x128xf32>
      %45 = vector.shape_cast %36 : vector<128x128xf32> to vector<1x128x128xf32>
      tpu.vector_store %arg5[%c0_21, %c0_22, %c0_23], %45 {strides = array<i32>} : memref<1x128x128xf32, #tpu.memory_space<vmem>>, vector<1x128x128xf32>,
    } else {
    }
    %c0_i32_19 = arith.constant 0 : i32
    %40 = arith.cmpi sgt, %arg1, %c0_i32_19 : i32
    %41 = arith.extui %40 : i1 to i32
    %c0_i32_20 = arith.constant 0 : i32
    %42 = arith.cmpi ne, %41, %c0_i32_20 : i32
    scf.if %42 {
      %c0_21 = arith.constant 0 : index
      %c0_22 = arith.constant 0 : index
      %c0_23 = arith.constant 0 : index
      %43 = vector.load %arg5[%c0_21, %c0_22, %c0_23] : memref<1x128x128xf32, #tpu.memory_space<vmem>>, vector<1x128x128xf32>
      %44 = vector.shape_cast %43 : vector<1x128x128xf32> to vector<128x128xf32>
      %45 = arith.addf %44, %36 : vector<128x128xf32>
      %c0_24 = arith.constant 0 : index
      %c0_25 = arith.constant 0 : index
      %c0_26 = arith.constant 0 : index
      %46 = vector.load %arg5[%c0_24, %c0_25, %c0_26] : memref<1x128x128xf32, #tpu.memory_space<vmem>>, vector<1x128x128xf32>
      %47 = vector.shape_cast %46 : vector<1x128x128xf32> to vector<128x128xf32>
      %48 = vector.shape_cast %45 : vector<128x128xf32> to vector<1x128x128xf32>
      tpu.vector_store %arg5[%c0_24, %c0_25, %c0_26], %48 {strides = array<i32>} : memref<1x128x128xf32, #tpu.memory_space<vmem>>, vector<1x128x128xf32>,
    } else {
    }
    return
  }
  func.func @transform_0(%arg0: i32, %arg1: i32) -> (i32, i32, i32, i32) {
    %c0_i32 = arith.constant 0 : i32
    %c0_i32_0 = arith.constant 0 : i32
    %c0_i32_1 = arith.constant 0 : i32
    return %arg0, %arg1, %c0_i32, %c0_i32_0 : i32, i32, i32, i32
  }
  func.func @transform_1(%arg0: i32, %arg1: i32) -> (i32, i32, i32) {
    %c0_i32 = arith.constant 0 : i32
    %c0_i32_0 = arith.constant 0 : i32
    %c0_i32_1 = arith.constant 0 : i32
    return %arg0, %c0_i32, %c0_i32_0 : i32, i32, i32
  }
  func.func @transform_2(%arg0: i32, %arg1: i32) -> (i32, i32, i32) {
    %c0_i32 = arith.constant 0 : i32
    %c0_i32_0 = arith.constant 0 : i32
    %c0_i32_1 = arith.constant 0 : i32
    return %arg1, %c0_i32, %c0_i32_0 : i32, i32, i32
  }
  func.func @transform_3(%arg0: i32, %arg1: i32) -> (i32, i32, i32) {
    %c0_i32 = arith.constant 0 : i32
    %c0_i32_0 = arith.constant 0 : i32
    %c0_i32_1 = arith.constant 0 : i32
    return %arg0, %c0_i32, %c0_i32_0 : i32, i32, i32
  }
}

</mosaic_0001>

<llo_original>
// kernel: tpu_custom_call.1
$region0: #{tpu_custom_call.1}
  #allocation0 [shape = 'u32[]', space=smem, size = 0x4, offset = 0x4, fixed_abs, tag = 'smem constant byte address 0x4 - core index']
  #allocation1 [shape = 'u32[144,128]{1,0:T(1,128)}', space=vmem, size = 0x12000, scoped, tag = 'internal scratch']
  %s0 = inlined_call_operand.hbm [shape: bf16[2,1,128,128], index: 0, kind: input, shape index: {}]
  %s1 = inlined_call_operand.hbm [shape: bf16[2,128,128], index: 1, kind: input, shape index: {}]
  %s2 = inlined_call_operand.hbm [shape: bf16[1,128,128], index: 2, kind: input, shape index: {}]
  %s3 = inlined_call_operand.hbm [shape: f32[2,128,128], index: 3, kind: output, shape index: {}]
  %s4 = sld [smem:[#allocation0]]
  $region65: #{tpu_custom_call.1} parent=0
    _
  %s6 = ssub.s32 1, %s4
  %s7 = scalar_select 0, %s6, %s4
  $region1: #{tpu_custom_call.1} parent=0
    #allocation2 [shape = 'u8[65536]{0}', space=vmem, size = 0x10000, scoped, tag = 'input window, operand 0']
    #allocation3 [shape = 's32[2]{0}', space=sflag, size = 0x8, scoped, tag = 'scoped memory for tpu_custom_call.1']
    #allocation4 [shape = 's32[2]{0}', space=sflag, size = 0x8, scoped, tag = 'scoped memory for tpu_custom_call.1']
    #allocation5 [shape = 'u8[65536]{0}', space=vmem, size = 0x10000, scoped, tag = 'input window, operand 1']
    #allocation6 [shape = 's32[2]{0}', space=sflag, size = 0x8, scoped, tag = 'scoped memory for tpu_custom_call.1']
    #allocation7 [shape = 'u8[32768]{0}', space=vmem, size = 0x8000, scoped, tag = 'input window, operand 2, single buffered']
    #allocation8 [shape = 'u8[131072]{0}', space=vmem, size = 0x20000, scoped, tag = 'output window, operand 0']
    %8 = vsyncpa [#allocation3], 0
    %s9 = scalar_lea.sflag [#allocation3], 1
    %10 = vsyncpa %s9, 0
    %11 = vsyncpa [#allocation6], 0
    %s12 = scalar_lea.sflag [#allocation6], 1
    %13 = vsyncpa %s12, 0
    %14 = vsyncpa [#allocation4], 0
    %s15 = scalar_lea.sflag [#allocation4], 1
    %16 = vsyncpa %s15, 0
    loop: start=0, step=1, limit=4
    $region2: #{tpu_custom_call.1} parent=1 // loop_pre_header
      _
    $region3: #{tpu_custom_call.1} parent=1 // loop_header
      %s18 = sphi 0, %s22
      %p19 = scmp.ge.s32.totalorder %s18, 4
      %s25 = sphi 0, %s37
      %s26 = sphi 0, %s33
      %s27 = sphi 0, %s25
      %s28 = sphi 0, %s26
      %s29 = sphi 0, %s27
      %s30 = sphi 0, %s28
      %s42 = sphi 0, %s44
      %s45 = sphi 0, %s42
      %s46 = sphi 0, %s45
      %s62 = sphi 0, %s46
      %s68 = sphi 0, %s70
      %s71 = sphi 0, %s68
      %s72 = sphi 0, %s71
      %s88 = sphi 0, %s72
      %s94 = sphi 0, %s96
      %s97 = sphi 0, %s94
      %s98 = sphi 0, %s97
      %s114 = sphi 0, %s98
      %s120 = sphi 0, %s122
      %s123 = sphi 0, %s120
      %s124 = sphi 0, %s123
      %s140 = sphi 0, %s124
    $region4: #{tpu_custom_call.1} parent=1 // loop_header_branch
      %21 = sbr.rel (%p19) target = $region8
    $region5: #{tpu_custom_call.1} parent=1 // loop_body
      %s23 = ssub.s32 %s18, 1
      %s24 = ssub.s32 %s18, 2
      %s31 = sadd.s32 1, %s26
      %p32 = scmp.ge.s32.totalorder %s31, 1
      %s33 = scalar_select %p32, 0, %s31
      %s34 = sadd.s32 1, %s25
      %s35 = scalar_select %p32, %s34, %s25
      %p36 = scmp.ge.s32.totalorder %s35, 2
      %s37 = scalar_select %p36, 0, %s35
      %s38 = ssub.s32 %s25, %s37
      %s39 = ssub.s32 %s26, %s33
      %s40 = sor.u32 %s38, %s39
      %p41 = scmp.eq.s32.totalorder %s40, 0
      %s43 = sadd.s32 %s42, 1
      %s44 = scalar_select %p41, %s42, %s43
      %p47 = pneg %p41
      %p48 = scmp.eq.s32.totalorder %s18, 1
      %p49 = por %p47, %p48
      %p50 = scmp.ne.s32.totalorder %s42, %s45
      %p51 = scmp.eq.s32.totalorder %s18, 0
      %p52 = por %p50, %p51
      %p53 = scmp.ne.s32.totalorder %s42, %s45
      %p54 = scmp.eq.s32.totalorder %s23, 1
      %p55 = por %p53, %p54
      %p56 = scmp.ne.s32.totalorder %s45, %s46
      %p57 = scmp.eq.s32.totalorder %s23, 0
      %p58 = por %p56, %p57
      %p59 = scmp.ne.s32.totalorder %s45, %s46
      %p60 = scmp.eq.s32.totalorder %s24, 1
      %p61 = por %p59, %p60
      %p63 = scmp.ne.s32.totalorder %s46, %s62
      %p64 = scmp.eq.s32.totalorder %s24, 0
      %p65 = por %p63, %p64
      %s66 = ssub.s32 %s25, %s37
      %p67 = scmp.eq.s32.totalorder %s66, 0
      %s69 = sadd.s32 %s68, 1
      %s70 = scalar_select %p67, %s68, %s69
      %p73 = pneg %p67
      %p74 = scmp.eq.s32.totalorder %s18, 1
      %p75 = por %p73, %p74
      %p76 = scmp.ne.s32.totalorder %s68, %s71
      %p77 = scmp.eq.s32.totalorder %s18, 0
      %p78 = por %p76, %p77
      %p79 = scmp.ne.s32.totalorder %s68, %s71
      %p80 = scmp.eq.s32.totalorder %s23, 1
      %p81 = por %p79, %p80
      %p82 = scmp.ne.s32.totalorder %s71, %s72
      %p83 = scmp.eq.s32.totalorder %s23, 0
      %p84 = por %p82, %p83
      %p85 = scmp.ne.s32.totalorder %s71, %s72
      %p86 = scmp.eq.s32.totalorder %s24, 1
      %p87 = por %p85, %p86
      %p89 = scmp.ne.s32.totalorder %s72, %s88
      %p90 = scmp.eq.s32.totalorder %s24, 0
      %p91 = por %p89, %p90
      %s92 = ssub.s32 %s26, %s33
      %p93 = scmp.eq.s32.totalorder %s92, 0
      %s95 = sadd.s32 %s94, 1
      %s96 = scalar_select %p93, %s94, %s95
      %p99 = pneg %p93
      %p100 = scmp.eq.s32.totalorder %s18, 1
      %p101 = por %p99, %p100
      %p102 = scmp.ne.s32.totalorder %s94, %s97
      %p103 = scmp.eq.s32.totalorder %s18, 0
      %p104 = por %p102, %p103
      %p105 = scmp.ne.s32.totalorder %s94, %s97
      %p106 = scmp.eq.s32.totalorder %s23, 1
      %p107 = por %p105, %p106
      %p108 = scmp.ne.s32.totalorder %s97, %s98
      %p109 = scmp.eq.s32.totalorder %s23, 0
      %p110 = por %p108, %p109
      %p111 = scmp.ne.s32.totalorder %s97, %s98
      %p112 = scmp.eq.s32.totalorder %s24, 1
      %p113 = por %p111, %p112
      %p115 = scmp.ne.s32.totalorder %s98, %s114
      %p116 = scmp.eq.s32.totalorder %s24, 0
      %p117 = por %p115, %p116
      %s118 = ssub.s32 %s25, %s37
      %p119 = scmp.eq.s32.totalorder %s118, 0
      %s121 = sadd.s32 %s120, 1
      %s122 = scalar_select %p119, %s120, %s121
      %p125 = pneg %p119
      %p126 = scmp.eq.s32.totalorder %s18, 1
      %p127 = por %p125, %p126
      %p128 = scmp.ne.s32.totalorder %s120, %s123
      %p129 = scmp.eq.s32.totalorder %s18, 0
      %p130 = por %p128, %p129
      %p131 = scmp.ne.s32.totalorder %s120, %s123
      %p132 = scmp.eq.s32.totalorder %s23, 1
      %p133 = por %p131, %p132
      %p134 = scmp.ne.s32.totalorder %s123, %s124
      %p135 = scmp.eq.s32.totalorder %s23, 0
      %p136 = por %p134, %p135
      %p137 = scmp.ne.s32.totalorder %s123, %s124
      %p138 = scmp.eq.s32.totalorder %s24, 1
      %p139 = por %p137, %p138
      %p141 = scmp.ne.s32.totalorder %s124, %s140
      %p142 = scmp.eq.s32.totalorder %s24, 0
      %p143 = por %p141, %p142
      %p144 = scmp.le.s32.totalorder 1, %s18
      %p145 = scmp.lt.s32.totalorder %s18, 3
      %p146 = pnand %p144, %p145
      %p147 = pneg %p146
      // Predicated region
      $region9: #{tpu_custom_call.1} parent=5 // pred_check
        _
      $region10: #{tpu_custom_call.1} parent=5 // pred_check_branch
        %149 = sbr.rel (%p146) target = $region12
      $region11: #{tpu_custom_call.1} parent=5 // pred_region
        %s150 = ssub.s32 %s18, 1
        // Predicated region
        $region13: #{tpu_custom_call.1} parent=11 // pred_check
          %p151 = pneg %p110
        $region14: #{tpu_custom_call.1} parent=11 // pred_check_branch
          %153 = sbr.rel (%p151) target = $region16
        $region15: #{tpu_custom_call.1} parent=11 // pred_region
          %s155 = ssub.s32 1024, 1024
          %156 = vsyncadd [#allocation6], %s155
          %s157 = smul.addr %s28, 16
          %s158 = smul.addr %s157, 64
          %s159 = scalar_lea.hbm %s2, %s158
          %s160 = sshll.u32 [#allocation7], 4
          %s161 = int_to_ptr.vmem [resolvable:$true] %s160
          %166 = dma.hbm_to_vmem [thread:$0]  %s159, 1024, %s161, [#allocation6], 64, 64, 4
        $region16: #{tpu_custom_call.1} parent=11 // pred_fallthru
          _
      $region12: #{tpu_custom_call.1} parent=5 // pred_fallthru
        _
      %p167 = scmp.lt.s32.totalorder %s18, 2
      // Predicated region
      $region17: #{tpu_custom_call.1} parent=5 // pred_check
        %p168 = pneg %p167
      $region18: #{tpu_custom_call.1} parent=5 // pred_check_branch
        %170 = sbr.rel (%p168) target = $region20
      $region19: #{tpu_custom_call.1} parent=5 // pred_region
        // Predicated region
        $region21: #{tpu_custom_call.1} parent=19 // pred_check
          %p171 = pneg %p52
        $region22: #{tpu_custom_call.1} parent=19 // pred_check_branch
          %173 = sbr.rel (%p171) target = $region24
        $region23: #{tpu_custom_call.1} parent=19 // pred_region
          %s174 = sand.u32 %s42, 1
          %s175 = scalar_lea.sflag [#allocation3], %s174
          %s176 = sand.u32 %s42, 1
          %s177 = smul.addr %s176, 64
          %s178 = scalar_lea.vmem [#allocation2], %s177
          %s180 = ssub.s32 1024, 1024
          %181 = vsyncadd %s175, %s180
          %s182 = smul.addr %s26, 16
          %s183 = smul.addr %s25, 16
          %s184 = sadd.s32 %s182, %s183
          %s185 = smul.addr %s184, 64
          %s186 = scalar_lea.hbm %s0, %s185
          %s187 = sshll.u32 %s178, 4
          %s188 = int_to_ptr.vmem [resolvable:$true] %s187
          %193 = dma.hbm_to_vmem [thread:$0]  %s186, 1024, %s188, %s175, 64, 64, 4
        $region24: #{tpu_custom_call.1} parent=19 // pred_fallthru
          _
        // Predicated region
        $region25: #{tpu_custom_call.1} parent=19 // pred_check
          %p194 = pneg %p78
        $region26: #{tpu_custom_call.1} parent=19 // pred_check_branch
          %196 = sbr.rel (%p194) target = $region28
        $region27: #{tpu_custom_call.1} parent=19 // pred_region
          %s197 = sand.u32 %s18, 1
          %s198 = scalar_lea.sflag [#allocation6], %s197
          %s199 = sand.u32 %s68, 1
          %s200 = smul.addr %s199, 64
          %s201 = scalar_lea.vmem [#allocation5], %s200
          %s203 = ssub.s32 1024, 1024
          %204 = vsyncadd %s198, %s203
          %s205 = smul.addr %s25, 16
          %s206 = smul.addr %s205, 64
          %s207 = scalar_lea.hbm %s1, %s206
          %s208 = sshll.u32 %s201, 4
          %s209 = int_to_ptr.vmem [resolvable:$true] %s208
          %214 = dma.hbm_to_vmem [thread:$0]  %s207, 1024, %s209, %s198, 64, 64, 4
        $region28: #{tpu_custom_call.1} parent=19 // pred_fallthru
          _
      $region20: #{tpu_custom_call.1} parent=5 // pred_fallthru
        _
      %p215 = scmp.le.s32.totalorder 1, %s18
      %p216 = scmp.lt.s32.totalorder %s18, 3
      %p217 = pnand %p215, %p216
      %p218 = pneg %p217
      // Predicated region
      $region29: #{tpu_custom_call.1} parent=5 // pred_check
        _
      $region30: #{tpu_custom_call.1} parent=5 // pred_check_branch
        %220 = sbr.rel (%p217) target = $region32
      $region31: #{tpu_custom_call.1} parent=5 // pred_region
        %s221 = ssub.s32 %s18, 1
        %s222 = sand.u32 %s45, 1
        %s223 = scalar_lea.sflag [#allocation3], %s222
        %s224 = sand.u32 %s45, 1
        %s225 = smul.addr %s224, 64
        %s226 = scalar_lea.vmem [#allocation2], %s225
        // Predicated region
        $region33: #{tpu_custom_call.1} parent=31 // pred_check
          %p227 = pneg %p58
        $region34: #{tpu_custom_call.1} parent=31 // pred_check_branch
          %229 = sbr.rel (%p227) target = $region36
        $region35: #{tpu_custom_call.1} parent=31 // pred_region
          %230 = dma.done %s223, 1024
        $region36: #{tpu_custom_call.1} parent=31 // pred_fallthru
          _
        %s231 = sand.u32 %s23, 1
        %s232 = scalar_lea.sflag [#allocation6], %s231
        %s233 = sand.u32 %s71, 1
        %s234 = smul.addr %s233, 64
        %s235 = scalar_lea.vmem [#allocation5], %s234
        // Predicated region
        $region37: #{tpu_custom_call.1} parent=31 // pred_check
          %p236 = pneg %p84
        $region38: #{tpu_custom_call.1} parent=31 // pred_check_branch
          %238 = sbr.rel (%p236) target = $region40
        $region39: #{tpu_custom_call.1} parent=31 // pred_region
          %239 = dma.done %s232, 1024
        $region40: #{tpu_custom_call.1} parent=31 // pred_fallthru
          _
        // Predicated region
        $region41: #{tpu_custom_call.1} parent=31 // pred_check
          %p240 = pneg %p110
        $region42: #{tpu_custom_call.1} parent=31 // pred_check_branch
          %242 = sbr.rel (%p240) target = $region44
        $region43: #{tpu_custom_call.1} parent=31 // pred_region
          %243 = dma.done [#allocation6], 1024
        $region44: #{tpu_custom_call.1} parent=31 // pred_fallthru
          _
        %s244 = sand.u32 %s45, 1
        %s245 = scalar_lea.sflag [#allocation3], %s244
        %s246 = sand.u32 %s45, 1
        %s247 = smul.addr %s246, 64
        %s248 = scalar_lea.vmem [#allocation2], %s247
        %p249 = pneg %p58
        %p250 = pneg %p55
        %s251 = sand.u32 %s23, 1
        %s252 = scalar_lea.sflag [#allocation6], %s251
        %s253 = sand.u32 %s71, 1
        %s254 = smul.addr %s253, 64
        %s255 = scalar_lea.vmem [#allocation5], %s254
        %p256 = pneg %p84
        %p257 = pneg %p81
        %p258 = pneg %p110
        %p259 = pneg %p107
        %p260 = pneg %p136
        %p261 = pneg %p133
        %s262 = sand.u32 %s123, 1
        %s263 = scalar_lea.sflag [#allocation4], %s262
        %s264 = sand.u32 %s123, 1
        %s265 = smul.addr %s264, 128
        %s266 = scalar_lea.vmem [#allocation8], %s265
        %v268 = vld [vmem:[%s226] sm:$0xf]
        %v269 = vld [vmem:[%s226 + $0x4] sm:$0xf]
        %v270 = vld [vmem:[%s226 + $0x8] sm:$0xf]
        %v271 = vld [vmem:[%s226 + $0xc] sm:$0xf]
        %v272 = vld [vmem:[%s226 + $0x10] sm:$0xf]
        %v273 = vld [vmem:[%s226 + $0x14] sm:$0xf]
        %v274 = vld [vmem:[%s226 + $0x18] sm:$0xf]
        %v275 = vld [vmem:[%s226 + $0x1c] sm:$0xf]
        %v276 = vld [vmem:[%s226 + $0x20] sm:$0xf]
        %v277 = vld [vmem:[%s226 + $0x24] sm:$0xf]
        %v278 = vld [vmem:[%s226 + $0x28] sm:$0xf]
        %v279 = vld [vmem:[%s226 + $0x2c] sm:$0xf]
        %v280 = vld [vmem:[%s226 + $0x30] sm:$0xf]
        %v281 = vld [vmem:[%s226 + $0x34] sm:$0xf]
        %v282 = vld [vmem:[%s226 + $0x38] sm:$0xf]
        %v283 = vld [vmem:[%s226 + $0x3c] sm:$0xf]
        %v284 = vunpack.c.l.bf16 %v268
        %v285 = vunpack.c.l.bf16 %v269
        %v286 = vunpack.c.l.bf16 %v270
        %v287 = vunpack.c.l.bf16 %v271
        %v288 = vunpack.c.l.bf16 %v272
        %v289 = vunpack.c.l.bf16 %v273
        %v290 = vunpack.c.l.bf16 %v274
        %v291 = vunpack.c.l.bf16 %v275
        %v292 = vunpack.c.l.bf16 %v276
        %v293 = vunpack.c.l.bf16 %v277
        %v294 = vunpack.c.l.bf16 %v278
        %v295 = vunpack.c.l.bf16 %v279
        %v296 = vunpack.c.l.bf16 %v280
        %v297 = vunpack.c.l.bf16 %v281
        %v298 = vunpack.c.l.bf16 %v282
        %v299 = vunpack.c.l.bf16 %v283
        %v300 = vadd.f32 %v284, %v285
        %v301 = vadd.f32 %v300, %v286
        %v302 = vadd.f32 %v301, %v287
        %v303 = vadd.f32 %v302, %v288
        %v304 = vadd.f32 %v303, %v289
        %v305 = vadd.f32 %v304, %v290
        %v306 = vadd.f32 %v305, %v291
        %v307 = vadd.f32 %v306, %v292
        %v308 = vadd.f32 %v307, %v293
        %v309 = vadd.f32 %v308, %v294
        %v310 = vadd.f32 %v309, %v295
        %v311 = vadd.f32 %v310, %v296
        %v312 = vadd.f32 %v311, %v297
        %v313 = vadd.f32 %v312, %v298
        %v314 = vadd.f32 %v313, %v299
        %v315 = vrot.slane %v314, 4
        %v316 = vadd.f32 %v314, %v315
        %v317 = vrot.slane %v316, 2
        %v318 = vadd.f32 %v316, %v317
        %v319 = vrot.slane %v318, 1
        %v320 = vadd.f32 %v318, %v319
        %v321 = vadd.f32 %v320, 1.0
        %322 = vxpose.xlu0.b32.start [1/16] %v284, 128
        %323 = vxpose.xlu0.b32.cont [2/16] %v285, 128
        %324 = vxpose.xlu0.b32.cont [3/16] %v286, 128
        %325 = vxpose.xlu0.b32.cont [4/16] %v287, 128
        %326 = vxpose.xlu0.b32.cont [5/16] %v288, 128
        %327 = vxpose.xlu0.b32.cont [6/16] %v289, 128
        %328 = vxpose.xlu0.b32.cont [7/16] %v290, 128
        %329 = vxpose.xlu0.b32.cont [8/16] %v291, 128
        %330 = vxpose.xlu0.b32.cont [9/16] %v292, 128
        %331 = vxpose.xlu0.b32.cont [10/16] %v293, 128
        %332 = vxpose.xlu0.b32.cont [11/16] %v294, 128
        %333 = vxpose.xlu0.b32.cont [12/16] %v295, 128
        %334 = vxpose.xlu0.b32.cont [13/16] %v296, 128
        %335 = vxpose.xlu0.b32.cont [14/16] %v297, 128
        %336 = vxpose.xlu0.b32.cont [15/16] %v298, 128
        %337 = vxpose.xlu0.b32.end [16/16] %v299, 128
        %v338 = vpop.trf.xlu0
        %v339 = vpop.trf.xlu0
        %v340 = vpop.trf.xlu0
        %v341 = vpop.trf.xlu0
        %v342 = vpop.trf.xlu0
        %v343 = vpop.trf.xlu0
        %v344 = vpop.trf.xlu0
        %v345 = vpop.trf.xlu0
        %v346 = vpop.trf.xlu0
        %v347 = vpop.trf.xlu0
        %v348 = vpop.trf.xlu0
        %v349 = vpop.trf.xlu0
        %v350 = vpop.trf.xlu0
        %v351 = vpop.trf.xlu0
        %v352 = vpop.trf.xlu0
        %v353 = vpop.trf.xlu0
        %354 = vmatprep.subr.mxu0 0.0
        %355 = vmatpush1.msra.mxu0 1.0
        %356 = vmatprep.subr.mxu0 0.0
        %357 = vmatpush1.msra.mxu0 1.0
        %358 = vmatprep.subr.mxu0 0.0
        %359 = vmatpush1.msra.mxu0 1.0
        %360 = vmatprep.subr.mxu0 0.0
        %361 = vmatpush1.msra.mxu0 1.0
        %362 = vmatprep.subr.mxu0 0.0
        %363 = vmatpush1.msra.mxu0 1.0
        %364 = vmatprep.subr.mxu0 0.0
        %365 = vmatpush1.msra.mxu0 1.0
        %366 = vmatprep.subr.mxu0 0.0
        %367 = vmatpush1.msra.mxu0 1.0
        %368 = vmatprep.subr.mxu0 0.0
        %369 = vmatpush1.msra.mxu0 1.0
        %370 = vmatprep.subr.mxu0 0.0
        %371 = vmatpush1.msra.mxu0 1.0
        %372 = vmatprep.subr.mxu0 0.0
        %373 = vmatpush1.msra.mxu0 1.0
        %374 = vmatprep.subr.mxu0 0.0
        %375 = vmatpush1.msra.mxu0 1.0
        %376 = vmatprep.subr.mxu0 0.0
        %377 = vmatpush1.msra.mxu0 1.0
        %378 = vmatprep.subr.mxu0 0.0
        %379 = vmatpush1.msra.mxu0 1.0
        %380 = vmatprep.subr.mxu0 0.0
        %381 = vmatpush1.msra.mxu0 1.0
        %382 = vmatprep.subr.mxu0 0.0
        %383 = vmatpush1.msra.mxu0 1.0
        %384 = vmatprep.subr.mxu0 0.0
        %385 = vmatpush1.msra.mxu0 1.0
        %386 = vmatprep.subr.mxu0 0.0
        %387 = vmatpush1.msra.mxu0 0.0
        %388 = vmatprep.subr.mxu0 0.0
        %389 = vmatpush1.msra.mxu0 0.0
        %390 = vmatprep.subr.mxu0 0.0
        %391 = vmatpush1.msra.mxu0 0.0
        %392 = vmatprep.subr.mxu0 0.0
        %393 = vmatpush1.msra.mxu0 0.0
        %394 = vmatprep.subr.mxu0 0.0
        %395 = vmatpush1.msra.mxu0 0.0
        %396 = vmatprep.subr.mxu0 0.0
        %397 = vmatpush1.msra.mxu0 0.0
        %398 = vmatprep.subr.mxu0 0.0
        %399 = vmatpush1.msra.mxu0 0.0
        %400 = vmatprep.subr.mxu0 0.0
        %401 = vmatpush1.msra.mxu0 0.0
        %402 = vmatprep.subr.mxu0 0.0
        %403 = vmatpush1.msra.mxu0 0.0
        %404 = vmatprep.subr.mxu0 0.0
        %405 = vmatpush1.msra.mxu0 0.0
        %406 = vmatprep.subr.mxu0 0.0
        %407 = vmatpush1.msra.mxu0 0.0
        %408 = vmatprep.subr.mxu0 0.0
        %409 = vmatpush1.msra.mxu0 0.0
        %410 = vmatprep.subr.mxu0 0.0
        %411 = vmatpush1.msra.mxu0 0.0
        %412 = vmatprep.subr.mxu0 0.0
        %413 = vmatpush1.msra.mxu0 0.0
        %414 = vmatprep.subr.mxu0 0.0
        %415 = vmatpush1.msra.mxu0 0.0
        %416 = vmatprep.subr.mxu0 0.0
        %417 = vmatpush1.msra.mxu0 0.0
        %418 = vmatprep.mubr.f32.mxu0 0.0
        %419 = vmatmul.mubr.f32.gmra.mrb[0].mxu0 %v338
        %v420 = vpop.f32.mrb[0].mxu0
        %v421 = vadd.f32 1.0, %v420
        %v422 = vpop.f32.mrb[0].mxu0
        %423 = vmatprep.mubr.f32.mxu0 0.0
        %424 = vmatmul.mubr.f32.gmra.mrb[0].mxu0 %v339
        %v425 = vpop.f32.mrb[0].mxu0
        %v426 = vadd.f32 1.0, %v425
        %v427 = vpop.f32.mrb[0].mxu0
        %428 = vmatprep.mubr.f32.mxu0 0.0
        %429 = vmatmul.mubr.f32.gmra.mrb[0].mxu0 %v340
        %v430 = vpop.f32.mrb[0].mxu0
        %v431 = vadd.f32 1.0, %v430
        %v432 = vpop.f32.mrb[0].mxu0
        %433 = vmatprep.mubr.f32.mxu0 0.0
        %434 = vmatmul.mubr.f32.gmra.mrb[0].mxu0 %v341
        %v435 = vpop.f32.mrb[0].mxu0
        %v436 = vadd.f32 1.0, %v435
        %v437 = vpop.f32.mrb[0].mxu0
        %438 = vmatprep.mubr.f32.mxu0 0.0
        %439 = vmatmul.mubr.f32.gmra.mrb[0].mxu0 %v342
        %v440 = vpop.f32.mrb[0].mxu0
        %v441 = vadd.f32 1.0, %v440
        %v442 = vpop.f32.mrb[0].mxu0
        %443 = vmatprep.mubr.f32.mxu0 0.0
        %444 = vmatmul.mubr.f32.gmra.mrb[0].mxu0 %v343
        %v445 = vpop.f32.mrb[0].mxu0
        %v446 = vadd.f32 1.0, %v445
        %v447 = vpop.f32.mrb[0].mxu0
        %448 = vmatprep.mubr.f32.mxu0 0.0
        %449 = vmatmul.mubr.f32.gmra.mrb[0].mxu0 %v344
        %v450 = vpop.f32.mrb[0].mxu0
        %v451 = vadd.f32 1.0, %v450
        %v452 = vpop.f32.mrb[0].mxu0
        %453 = vmatprep.mubr.f32.mxu0 0.0
        %454 = vmatmul.mubr.f32.gmra.mrb[0].mxu0 %v345
        %v455 = vpop.f32.mrb[0].mxu0
        %v456 = vadd.f32 1.0, %v455
        %v457 = vpop.f32.mrb[0].mxu0
        %458 = vmatprep.mubr.f32.mxu0 0.0
        %459 = vmatmul.mubr.f32.gmra.mrb[0].mxu0 %v346
        %v460 = vpop.f32.mrb[0].mxu0
        %v461 = vadd.f32 1.0, %v460
        %v462 = vpop.f32.mrb[0].mxu0
        %463 = vmatprep.mubr.f32.mxu0 0.0
        %464 = vmatmul.mubr.f32.gmra.mrb[0].mxu0 %v347
        %v465 = vpop.f32.mrb[0].mxu0
        %v466 = vadd.f32 1.0, %v465
        %v467 = vpop.f32.mrb[0].mxu0
        %468 = vmatprep.mubr.f32.mxu0 0.0
        %469 = vmatmul.mubr.f32.gmra.mrb[0].mxu0 %v348
        %v470 = vpop.f32.mrb[0].mxu0
        %v471 = vadd.f32 1.0, %v470
        %v472 = vpop.f32.mrb[0].mxu0
        %473 = vmatprep.mubr.f32.mxu0 0.0
        %474 = vmatmul.mubr.f32.gmra.mrb[0].mxu0 %v349
        %v475 = vpop.f32.mrb[0].mxu0
        %v476 = vadd.f32 1.0, %v475
        %v477 = vpop.f32.mrb[0].mxu0
        %478 = vmatprep.mubr.f32.mxu0 0.0
        %479 = vmatmul.mubr.f32.gmra.mrb[0].mxu0 %v350
        %v480 = vpop.f32.mrb[0].mxu0
        %v481 = vadd.f32 1.0, %v480
        %v482 = vpop.f32.mrb[0].mxu0
        %483 = vmatprep.mubr.f32.mxu0 0.0
        %484 = vmatmul.mubr.f32.gmra.mrb[0].mxu0 %v351
        %v485 = vpop.f32.mrb[0].mxu0
        %v486 = vadd.f32 1.0, %v485
        %v487 = vpop.f32.mrb[0].mxu0
        %488 = vmatprep.mubr.f32.mxu0 0.0
        %489 = vmatmul.mubr.f32.gmra.mrb[0].mxu0 %v352
        %v490 = vpop.f32.mrb[0].mxu0
        %v491 = vadd.f32 1.0, %v490
        %v492 = vpop.f32.mrb[0].mxu0
        %493 = vmatprep.mubr.f32.mxu0 0.0
        %494 = vmatmul.mubr.f32.gmra.mrb[0].mxu0 %v353
        %v495 = vpop.f32.mrb[0].mxu0
        %v496 = vadd.f32 1.0, %v495
        %v497 = vpop.f32.mrb[0].mxu0
        %498 = vdwg.mxu0
        %v499 = vadd.f32 %v321, 1e-05
        %v500 = vrsqrt.pop %v499
        %v501 = vadd.f32 %v421, 1e-05
        %v502 = vadd.f32 %v426, 1e-05
        %v503 = vadd.f32 %v431, 1e-05
        %v504 = vadd.f32 %v436, 1e-05
        %v505 = vadd.f32 %v441, 1e-05
        %v506 = vadd.f32 %v446, 1e-05
        %v507 = vadd.f32 %v451, 1e-05
        %v508 = vadd.f32 %v456, 1e-05
        %v509 = vadd.f32 %v461, 1e-05
        %v510 = vadd.f32 %v466, 1e-05
        %v511 = vadd.f32 %v471, 1e-05
        %v512 = vadd.f32 %v476, 1e-05
        %v513 = vadd.f32 %v481, 1e-05
        %v514 = vadd.f32 %v486, 1e-05
        %v515 = vadd.f32 %v491, 1e-05
        %v516 = vadd.f32 %v496, 1e-05
        %v517 = vrsqrt.pop %v501
        %v518 = vrsqrt.pop %v502
        %v519 = vrsqrt.pop %v503
        %v520 = vrsqrt.pop %v504
        %v521 = vrsqrt.pop %v505
        %v522 = vrsqrt.pop %v506
        %v523 = vrsqrt.pop %v507
        %v524 = vrsqrt.pop %v508
        %v525 = vrsqrt.pop %v509
        %v526 = vrsqrt.pop %v510
        %v527 = vrsqrt.pop %v511
        %v528 = vrsqrt.pop %v512
        %v529 = vrsqrt.pop %v513
        %v530 = vrsqrt.pop %v514
        %v531 = vrsqrt.pop %v515
        %v532 = vrsqrt.pop %v516
        %v533 = vpack.c.bf16 %v518, %v517
        %v534 = vpack.c.bf16 %v520, %v519
        %v535 = vpack.c.bf16 %v522, %v521
        %v536 = vpack.c.bf16 %v524, %v523
        %v537 = vpack.c.bf16 %v526, %v525
        %v538 = vpack.c.bf16 %v528, %v527
        %v539 = vpack.c.bf16 %v530, %v529
        %v540 = vpack.c.bf16 %v532, %v531
        %542 = vset.pattern.permute.xlu0 0
        %543 = vperm.xlu0 %542, %v533
        %v544 = vpop.permute.xlu0 %543
        %547 = vset.pattern.permute.xlu0 0
        %548 = vperm.xlu0 %547, %v534
        %v549 = vpop.permute.xlu0 %548
        %552 = vset.pattern.permute.xlu0 0
        %553 = vperm.xlu0 %552, %v535
        %v554 = vpop.permute.xlu0 %553
        %557 = vset.pattern.permute.xlu0 0
        %558 = vperm.xlu0 %557, %v536
        %v559 = vpop.permute.xlu0 %558
        %562 = vset.pattern.permute.xlu0 0
        %563 = vperm.xlu0 %562, %v537
        %v564 = vpop.permute.xlu0 %563
        %567 = vset.pattern.permute.xlu0 0
        %568 = vperm.xlu0 %567, %v538
        %v569 = vpop.permute.xlu0 %568
        %572 = vset.pattern.permute.xlu0 0
        %573 = vperm.xlu0 %572, %v539
        %v574 = vpop.permute.xlu0 %573
        %577 = vset.pattern.permute.xlu0 0
        %578 = vperm.xlu0 %577, %v540
        %v579 = vpop.permute.xlu0 %578
        %v597 = vunpack.c.l.b16 %v268
        %v598 = vunpack.c.l.b16 %v269
        %v599 = vunpack.c.l.b16 %v270
        %v600 = vunpack.c.l.b16 %v271
        %v601 = vunpack.c.l.b16 %v272
        %v602 = vunpack.c.l.b16 %v273
        %v603 = vunpack.c.l.b16 %v274
        %v604 = vunpack.c.l.b16 %v275
        %v605 = vunpack.c.l.b16 %v276
        %v606 = vunpack.c.l.b16 %v277
        %v607 = vunpack.c.l.b16 %v278
        %v608 = vunpack.c.l.b16 %v279
        %v609 = vunpack.c.l.b16 %v280
        %v610 = vunpack.c.l.b16 %v281
        %v611 = vunpack.c.l.b16 %v282
        %v612 = vunpack.c.l.b16 %v283
        %v613 = vpack.c.b16 %v598, %v597
        %v614 = vpack.c.b16 %v600, %v599
        %v615 = vpack.c.b16 %v602, %v601
        %v616 = vpack.c.b16 %v604, %v603
        %v617 = vpack.c.b16 %v606, %v605
        %v618 = vpack.c.b16 %v608, %v607
        %v619 = vpack.c.b16 %v610, %v609
        %v620 = vpack.c.b16 %v612, %v611
        %v629 = vmul.bf16 %v544, %v613
        %v630 = vmul.bf16 %v549, %v614
        %v631 = vmul.bf16 %v554, %v615
        %v632 = vmul.bf16 %v559, %v616
        %v633 = vmul.bf16 %v564, %v617
        %v634 = vmul.bf16 %v569, %v618
        %v635 = vmul.bf16 %v574, %v619
        %v636 = vmul.bf16 %v579, %v620
        %v637 = vpack.c.bf16 %v500, %v500
        %v638 = vmul.bf16 %v629, %v637
        %v639 = vmul.bf16 %v630, %v637
        %v640 = vmul.bf16 %v631, %v637
        %v641 = vmul.bf16 %v632, %v637
        %v642 = vmul.bf16 %v633, %v637
        %v643 = vmul.bf16 %v634, %v637
        %v644 = vmul.bf16 %v635, %v637
        %v645 = vmul.bf16 %v636, %v637
        %v646 = vld [vmem:[%s235] sm:$0xf]
        %v647 = vld [vmem:[%s235 + $0x4] sm:$0xf]
        %v648 = vld [vmem:[%s235 + $0x8] sm:$0xf]
        %v649 = vld [vmem:[%s235 + $0xc] sm:$0xf]
        %v650 = vld [vmem:[%s235 + $0x10] sm:$0xf]
        %v651 = vld [vmem:[%s235 + $0x14] sm:$0xf]
        %v652 = vld [vmem:[%s235 + $0x18] sm:$0xf]
        %v653 = vld [vmem:[%s235 + $0x1c] sm:$0xf]
        %v654 = vld [vmem:[%s235 + $0x20] sm:$0xf]
        %v655 = vld [vmem:[%s235 + $0x24] sm:$0xf]
        %v656 = vld [vmem:[%s235 + $0x28] sm:$0xf]
        %v657 = vld [vmem:[%s235 + $0x2c] sm:$0xf]
        %v658 = vld [vmem:[%s235 + $0x30] sm:$0xf]
        %v659 = vld [vmem:[%s235 + $0x34] sm:$0xf]
        %v660 = vld [vmem:[%s235 + $0x38] sm:$0xf]
        %v661 = vld [vmem:[%s235 + $0x3c] sm:$0xf]
        %v662 = vld [vmem:[#allocation7] sm:$0xf]
        %v663 = vld [vmem:[#allocation7 + $0x4] sm:$0xf]
        %v664 = vld [vmem:[#allocation7 + $0x8] sm:$0xf]
        %v665 = vld [vmem:[#allocation7 + $0xc] sm:$0xf]
        %v666 = vld [vmem:[#allocation7 + $0x10] sm:$0xf]
        %v667 = vld [vmem:[#allocation7 + $0x14] sm:$0xf]
        %v668 = vld [vmem:[#allocation7 + $0x18] sm:$0xf]
        %v669 = vld [vmem:[#allocation7 + $0x1c] sm:$0xf]
        %v670 = vld [vmem:[#allocation7 + $0x20] sm:$0xf]
        %v671 = vld [vmem:[#allocation7 + $0x24] sm:$0xf]
        %v672 = vld [vmem:[#allocation7 + $0x28] sm:$0xf]
        %v673 = vld [vmem:[#allocation7 + $0x2c] sm:$0xf]
        %v674 = vld [vmem:[#allocation7 + $0x30] sm:$0xf]
        %v675 = vld [vmem:[#allocation7 + $0x34] sm:$0xf]
        %v676 = vld [vmem:[#allocation7 + $0x38] sm:$0xf]
        %v677 = vld [vmem:[#allocation7 + $0x3c] sm:$0xf]
        %v678 = vmul.f32 %v517, %v517
        %v679 = vmul.f32 %v518, %v518
        %v680 = vmul.f32 %v519, %v519
        %v681 = vmul.f32 %v520, %v520
        %v682 = vmul.f32 %v521, %v521
        %v683 = vmul.f32 %v522, %v522
        %v684 = vmul.f32 %v523, %v523
        %v685 = vmul.f32 %v524, %v524
        %v686 = vmul.f32 %v525, %v525
        %v687 = vmul.f32 %v526, %v526
        %v688 = vmul.f32 %v527, %v527
        %v689 = vmul.f32 %v528, %v528
        %v690 = vmul.f32 %v529, %v529
        %v691 = vmul.f32 %v530, %v530
        %v692 = vmul.f32 %v531, %v531
        %v693 = vmul.f32 %v532, %v532
        %v694 = vunpack.c.l.bf16 %v646
        %v695 = vunpack.c.l.bf16 %v647
        %v696 = vunpack.c.l.bf16 %v648
        %v697 = vunpack.c.l.bf16 %v649
        %v698 = vunpack.c.l.bf16 %v650
        %v699 = vunpack.c.l.bf16 %v651
        %v700 = vunpack.c.l.bf16 %v652
        %v701 = vunpack.c.l.bf16 %v653
        %v702 = vunpack.c.l.bf16 %v654
        %v703 = vunpack.c.l.bf16 %v655
        %v704 = vunpack.c.l.bf16 %v656
        %v705 = vunpack.c.l.bf16 %v657
        %v706 = vunpack.c.l.bf16 %v658
        %v707 = vunpack.c.l.bf16 %v659
        %v708 = vunpack.c.l.bf16 %v660
        %v709 = vunpack.c.l.bf16 %v661
        %711 = vset.pattern.permute.xlu0 0
        %712 = vperm.xlu0 %711, %v678
        %v713 = vpop.permute.xlu0 %712
        %716 = vset.pattern.permute.xlu0 0
        %717 = vperm.xlu0 %716, %v679
        %v718 = vpop.permute.xlu0 %717
        %721 = vset.pattern.permute.xlu0 0
        %722 = vperm.xlu0 %721, %v680
        %v723 = vpop.permute.xlu0 %722
        %726 = vset.pattern.permute.xlu0 0
        %727 = vperm.xlu0 %726, %v681
        %v728 = vpop.permute.xlu0 %727
        %731 = vset.pattern.permute.xlu0 0
        %732 = vperm.xlu0 %731, %v682
        %v733 = vpop.permute.xlu0 %732
        %736 = vset.pattern.permute.xlu0 0
        %737 = vperm.xlu0 %736, %v683
        %v738 = vpop.permute.xlu0 %737
        %741 = vset.pattern.permute.xlu0 0
        %742 = vperm.xlu0 %741, %v684
        %v743 = vpop.permute.xlu0 %742
        %746 = vset.pattern.permute.xlu0 0
        %747 = vperm.xlu0 %746, %v685
        %v748 = vpop.permute.xlu0 %747
        %751 = vset.pattern.permute.xlu0 0
        %752 = vperm.xlu0 %751, %v686
        %v753 = vpop.permute.xlu0 %752
        %756 = vset.pattern.permute.xlu0 0
        %757 = vperm.xlu0 %756, %v687
        %v758 = vpop.permute.xlu0 %757
        %761 = vset.pattern.permute.xlu0 0
        %762 = vperm.xlu0 %761, %v688
        %v763 = vpop.permute.xlu0 %762
        %766 = vset.pattern.permute.xlu0 0
        %767 = vperm.xlu0 %766, %v689
        %v768 = vpop.permute.xlu0 %767
        %771 = vset.pattern.permute.xlu0 0
        %772 = vperm.xlu0 %771, %v690
        %v773 = vpop.permute.xlu0 %772
        %776 = vset.pattern.permute.xlu0 0
        %777 = vperm.xlu0 %776, %v691
        %v778 = vpop.permute.xlu0 %777
        %781 = vset.pattern.permute.xlu0 0
        %782 = vperm.xlu0 %781, %v692
        %v783 = vpop.permute.xlu0 %782
        %786 = vset.pattern.permute.xlu0 0
        %787 = vperm.xlu0 %786, %v693
        %v788 = vpop.permute.xlu0 %787
        %v790 = vmul.f32 %v713, %v694
        %v791 = vmul.f32 %v718, %v695
        %v792 = vmul.f32 %v723, %v696
        %v793 = vmul.f32 %v728, %v697
        %v794 = vmul.f32 %v733, %v698
        %v795 = vmul.f32 %v738, %v699
        %v796 = vmul.f32 %v743, %v700
        %v797 = vmul.f32 %v748, %v701
        %v798 = vmul.f32 %v753, %v702
        %v799 = vmul.f32 %v758, %v703
        %v800 = vmul.f32 %v763, %v704
        %v801 = vmul.f32 %v768, %v705
        %v802 = vmul.f32 %v773, %v706
        %v803 = vmul.f32 %v778, %v707
        %v804 = vmul.f32 %v783, %v708
        %v805 = vmul.f32 %v788, %v709
        %v822 = vunpack.c.l.b16 %v646
        %v823 = vunpack.c.l.b16 %v647
        %v824 = vunpack.c.l.b16 %v648
        %v825 = vunpack.c.l.b16 %v649
        %v826 = vunpack.c.l.b16 %v650
        %v827 = vunpack.c.l.b16 %v651
        %v828 = vunpack.c.l.b16 %v652
        %v829 = vunpack.c.l.b16 %v653
        %v830 = vunpack.c.l.b16 %v654
        %v831 = vunpack.c.l.b16 %v655
        %v832 = vunpack.c.l.b16 %v656
        %v833 = vunpack.c.l.b16 %v657
        %v834 = vunpack.c.l.b16 %v658
        %v835 = vunpack.c.l.b16 %v659
        %v836 = vunpack.c.l.b16 %v660
        %v837 = vunpack.c.l.b16 %v661
        %v838 = vpack.c.b16 %v823, %v822
        %v839 = vpack.c.b16 %v825, %v824
        %v840 = vpack.c.b16 %v827, %v826
        %v841 = vpack.c.b16 %v829, %v828
        %v842 = vpack.c.b16 %v831, %v830
        %v843 = vpack.c.b16 %v833, %v832
        %v844 = vpack.c.b16 %v835, %v834
        %v845 = vpack.c.b16 %v837, %v836
        %854 = vmatprep.subr.bf16.mxu0 0
        %855 = vmatpush1.bf16.msra.mxu0 %v838
        %856 = vmatprep.subr.bf16.mxu0 0
        %857 = vmatpush1.bf16.msra.mxu0 %v839
        %858 = vmatprep.subr.bf16.mxu0 0
        %859 = vmatpush1.bf16.msra.mxu0 %v840
        %860 = vmatprep.subr.bf16.mxu0 0
        %861 = vmatpush1.bf16.msra.mxu0 %v841
        %862 = vmatprep.subr.bf16.mxu0 0
        %863 = vmatpush1.bf16.msra.mxu0 %v842
        %864 = vmatprep.subr.bf16.mxu0 0
        %865 = vmatpush1.bf16.msra.mxu0 %v843
        %866 = vmatprep.subr.bf16.mxu0 0
        %867 = vmatpush1.bf16.msra.mxu0 %v844
        %868 = vmatprep.subr.bf16.mxu0 0
        %869 = vmatpush1.bf16.msra.mxu0 %v845
        %870 = vmatprep.subr.bf16.mxu0 0
        %871 = vmatpush1.bf16.msra.mxu0 0
        %872 = vmatprep.subr.bf16.mxu0 0
        %873 = vmatpush1.bf16.msra.mxu0 0
        %874 = vmatprep.subr.bf16.mxu0 0
        %875 = vmatpush1.bf16.msra.mxu0 0
        %876 = vmatprep.subr.bf16.mxu0 0
        %877 = vmatpush1.bf16.msra.mxu0 0
        %878 = vmatprep.subr.bf16.mxu0 0
        %879 = vmatpush1.bf16.msra.mxu0 0
        %880 = vmatprep.subr.bf16.mxu0 0
        %881 = vmatpush1.bf16.msra.mxu0 0
        %882 = vmatprep.subr.bf16.mxu0 0
        %883 = vmatpush1.bf16.msra.mxu0 0
        %884 = vmatprep.subr.bf16.mxu0 0
        %885 = vmatpush1.bf16.msra.mxu0 0
        %886 = vmatprep.mubr.bf16.mxu0 0
        %887 = vmatmul.mubr.bf16.gmra.mrb[0].mxu0 %v638
        %v888 = vpop.f32.mrb[0].mxu0
        %v889 = vadd.f32 %v790, %v888
        %v890 = vpop.f32.mrb[0].mxu0
        %v891 = vpop.f32.mrb[0].mxu0
        %v892 = vadd.f32 %v791, %v891
        %v893 = vpop.f32.mrb[0].mxu0
        %894 = vmatprep.mubr.bf16.mxu0 0
        %895 = vmatmul.mubr.bf16.gmra.mrb[0].mxu0 %v639
        %v896 = vpop.f32.mrb[0].mxu0
        %v897 = vadd.f32 %v792, %v896
        %v898 = vpop.f32.mrb[0].mxu0
        %v899 = vpop.f32.mrb[0].mxu0
        %v900 = vadd.f32 %v793, %v899
        %v901 = vpop.f32.mrb[0].mxu0
        %902 = vmatprep.mubr.bf16.mxu0 0
        %903 = vmatmul.mubr.bf16.gmra.mrb[0].mxu0 %v640
        %v904 = vpop.f32.mrb[0].mxu0
        %v905 = vadd.f32 %v794, %v904
        %v906 = vpop.f32.mrb[0].mxu0
        %v907 = vpop.f32.mrb[0].mxu0
        %v908 = vadd.f32 %v795, %v907
        %v909 = vpop.f32.mrb[0].mxu0
        %910 = vmatprep.mubr.bf16.mxu0 0
        %911 = vmatmul.mubr.bf16.gmra.mrb[0].mxu0 %v641
        %v912 = vpop.f32.mrb[0].mxu0
        %v913 = vadd.f32 %v796, %v912
        %v914 = vpop.f32.mrb[0].mxu0
        %v915 = vpop.f32.mrb[0].mxu0
        %v916 = vadd.f32 %v797, %v915
        %v917 = vpop.f32.mrb[0].mxu0
        %918 = vmatprep.mubr.bf16.mxu0 0
        %919 = vmatmul.mubr.bf16.gmra.mrb[0].mxu0 %v642
        %v920 = vpop.f32.mrb[0].mxu0
        %v921 = vadd.f32 %v798, %v920
        %v922 = vpop.f32.mrb[0].mxu0
        %v923 = vpop.f32.mrb[0].mxu0
        %v924 = vadd.f32 %v799, %v923
        %v925 = vpop.f32.mrb[0].mxu0
        %926 = vmatprep.mubr.bf16.mxu0 0
        %927 = vmatmul.mubr.bf16.gmra.mrb[0].mxu0 %v643
        %v928 = vpop.f32.mrb[0].mxu0
        %v929 = vadd.f32 %v800, %v928
        %v930 = vpop.f32.mrb[0].mxu0
        %v931 = vpop.f32.mrb[0].mxu0
        %v932 = vadd.f32 %v801, %v931
        %v933 = vpop.f32.mrb[0].mxu0
        %934 = vmatprep.mubr.bf16.mxu0 0
        %935 = vmatmul.mubr.bf16.gmra.mrb[0].mxu0 %v644
        %v936 = vpop.f32.mrb[0].mxu0
        %v937 = vadd.f32 %v802, %v936
        %v938 = vpop.f32.mrb[0].mxu0
        %v939 = vpop.f32.mrb[0].mxu0
        %v940 = vadd.f32 %v803, %v939
        %v941 = vpop.f32.mrb[0].mxu0
        %942 = vmatprep.mubr.bf16.mxu0 0
        %943 = vmatmul.mubr.bf16.gmra.mrb[0].mxu0 %v645
        %v944 = vpop.f32.mrb[0].mxu0
        %v945 = vadd.f32 %v804, %v944
        %v946 = vpop.f32.mrb[0].mxu0
        %v947 = vpop.f32.mrb[0].mxu0
        %v948 = vadd.f32 %v805, %v947
        %v949 = vpop.f32.mrb[0].mxu0
        %950 = vdwg.mxu0
        %v951 = vpack.c.bf16 %v892, %v889
        %v952 = vpack.c.bf16 %v900, %v897
        %v953 = vpack.c.bf16 %v908, %v905
        %v954 = vpack.c.bf16 %v916, %v913
        %v955 = vpack.c.bf16 %v924, %v921
        %v956 = vpack.c.bf16 %v932, %v929
        %v957 = vpack.c.bf16 %v940, %v937
        %v958 = vpack.c.bf16 %v948, %v945
        %v975 = vunpack.c.l.b16 %v662
        %v976 = vunpack.c.l.b16 %v663
        %v977 = vunpack.c.l.b16 %v664
        %v978 = vunpack.c.l.b16 %v665
        %v979 = vunpack.c.l.b16 %v666
        %v980 = vunpack.c.l.b16 %v667
        %v981 = vunpack.c.l.b16 %v668
        %v982 = vunpack.c.l.b16 %v669
        %v983 = vunpack.c.l.b16 %v670
        %v984 = vunpack.c.l.b16 %v671
        %v985 = vunpack.c.l.b16 %v672
        %v986 = vunpack.c.l.b16 %v673
        %v987 = vunpack.c.l.b16 %v674
        %v988 = vunpack.c.l.b16 %v675
        %v989 = vunpack.c.l.b16 %v676
        %v990 = vunpack.c.l.b16 %v677
        %v991 = vpack.c.b16 %v976, %v975
        %v992 = vpack.c.b16 %v978, %v977
        %v993 = vpack.c.b16 %v980, %v979
        %v994 = vpack.c.b16 %v982, %v981
        %v995 = vpack.c.b16 %v984, %v983
        %v996 = vpack.c.b16 %v986, %v985
        %v997 = vpack.c.b16 %v988, %v987
        %v998 = vpack.c.b16 %v990, %v989
        %1007 = vmatprep.subr.bf16.mxu0 0
        %1008 = vmatpush1.bf16.msra.mxu0 %v991
        %1009 = vmatprep.subr.bf16.mxu0 0
        %1010 = vmatpush1.bf16.msra.mxu0 %v992
        %1011 = vmatprep.subr.bf16.mxu0 0
        %1012 = vmatpush1.bf16.msra.mxu0 %v993
        %1013 = vmatprep.subr.bf16.mxu0 0
        %1014 = vmatpush1.bf16.msra.mxu0 %v994
        %1015 = vmatprep.subr.bf16.mxu0 0
        %1016 = vmatpush1.bf16.msra.mxu0 %v995
        %1017 = vmatprep.subr.bf16.mxu0 0
        %1018 = vmatpush1.bf16.msra.mxu0 %v996
        %1019 = vmatprep.subr.bf16.mxu0 0
        %1020 = vmatpush1.bf16.msra.mxu0 %v997
        %1021 = vmatprep.subr.bf16.mxu0 0
        %1022 = vmatpush1.bf16.msra.mxu0 %v998
        %1023 = vmatprep.subr.bf16.mxu0 0
        %1024 = vmatpush1.bf16.msra.mxu0 0
        %1025 = vmatprep.subr.bf16.mxu0 0
        %1026 = vmatpush1.bf16.msra.mxu0 0
        %1027 = vmatprep.subr.bf16.mxu0 0
        %1028 = vmatpush1.bf16.msra.mxu0 0
        %1029 = vmatprep.subr.bf16.mxu0 0
        %1030 = vmatpush1.bf16.msra.mxu0 0
        %1031 = vmatprep.subr.bf16.mxu0 0
        %1032 = vmatpush1.bf16.msra.mxu0 0
        %1033 = vmatprep.subr.bf16.mxu0 0
        %1034 = vmatpush1.bf16.msra.mxu0 0
        %1035 = vmatprep.subr.bf16.mxu0 0
        %1036 = vmatpush1.bf16.msra.mxu0 0
        %1037 = vmatprep.subr.bf16.mxu0 0
        %1038 = vmatpush1.bf16.msra.mxu0 0
        %1039 = vmatprep.mubr.bf16.mxu0 0
        %1040 = vmatmul.mubr.bf16.gmra.mrb[0].mxu0 %v951
        %v1041 = vpop.f32.mrb[0].mxu0
        %v1042 = vadd.f32 0.0, %v1041
        %v1043 = vpop.f32.mrb[0].mxu0
        %v1044 = vpop.f32.mrb[0].mxu0
        %v1045 = vadd.f32 0.0, %v1044
        %v1046 = vpop.f32.mrb[0].mxu0
        %1047 = vmatprep.mubr.bf16.mxu0 0
        %1048 = vmatmul.mubr.bf16.gmra.mrb[0].mxu0 %v952
        %v1049 = vpop.f32.mrb[0].mxu0
        %v1050 = vadd.f32 0.0, %v1049
        %v1051 = vpop.f32.mrb[0].mxu0
        %v1052 = vpop.f32.mrb[0].mxu0
        %v1053 = vadd.f32 0.0, %v1052
        %v1054 = vpop.f32.mrb[0].mxu0
        %1055 = vmatprep.mubr.bf16.mxu0 0
        %1056 = vmatmul.mubr.bf16.gmra.mrb[0].mxu0 %v953
        %v1057 = vpop.f32.mrb[0].mxu0
        %v1058 = vadd.f32 0.0, %v1057
        %v1059 = vpop.f32.mrb[0].mxu0
        %v1060 = vpop.f32.mrb[0].mxu0
        %v1061 = vadd.f32 0.0, %v1060
        %v1062 = vpop.f32.mrb[0].mxu0
        %1063 = vmatprep.mubr.bf16.mxu0 0
        %1064 = vmatmul.mubr.bf16.gmra.mrb[0].mxu0 %v954
        %v1065 = vpop.f32.mrb[0].mxu0
        %v1066 = vadd.f32 0.0, %v1065
        %v1067 = vpop.f32.mrb[0].mxu0
        %v1068 = vpop.f32.mrb[0].mxu0
        %v1069 = vadd.f32 0.0, %v1068
        %v1070 = vpop.f32.mrb[0].mxu0
        %1071 = vmatprep.mubr.bf16.mxu0 0
        %1072 = vmatmul.mubr.bf16.gmra.mrb[0].mxu0 %v955
        %v1073 = vpop.f32.mrb[0].mxu0
        %v1074 = vadd.f32 0.0, %v1073
        %v1075 = vpop.f32.mrb[0].mxu0
        %v1076 = vpop.f32.mrb[0].mxu0
        %v1077 = vadd.f32 0.0, %v1076
        %v1078 = vpop.f32.mrb[0].mxu0
        %1079 = vmatprep.mubr.bf16.mxu0 0
        %1080 = vmatmul.mubr.bf16.gmra.mrb[0].mxu0 %v956
        %v1081 = vpop.f32.mrb[0].mxu0
        %v1082 = vadd.f32 0.0, %v1081
        %v1083 = vpop.f32.mrb[0].mxu0
        %v1084 = vpop.f32.mrb[0].mxu0
        %v1085 = vadd.f32 0.0, %v1084
        %v1086 = vpop.f32.mrb[0].mxu0
        %1087 = vmatprep.mubr.bf16.mxu0 0
        %1088 = vmatmul.mubr.bf16.gmra.mrb[0].mxu0 %v957
        %v1089 = vpop.f32.mrb[0].mxu0
        %v1090 = vadd.f32 0.0, %v1089
        %v1091 = vpop.f32.mrb[0].mxu0
        %v1092 = vpop.f32.mrb[0].mxu0
        %v1093 = vadd.f32 0.0, %v1092
        %v1094 = vpop.f32.mrb[0].mxu0
        %1095 = vmatprep.mubr.bf16.mxu0 0
        %1096 = vmatmul.mubr.bf16.gmra.mrb[0].mxu0 %v958
        %v1097 = vpop.f32.mrb[0].mxu0
        %v1098 = vadd.f32 0.0, %v1097
        %v1099 = vpop.f32.mrb[0].mxu0
        %v1100 = vpop.f32.mrb[0].mxu0
        %v1101 = vadd.f32 0.0, %v1100
        %v1102 = vpop.f32.mrb[0].mxu0
        %1103 = vdwg.mxu0
        %p1104 = scmp.eq.s32.totalorder %s28, 0
        // Predicated region
        $region45: #{tpu_custom_call.1} parent=31 // pred_check
          %p1105 = pneg %p1104
        $region46: #{tpu_custom_call.1} parent=31 // pred_check_branch
          %1107 = sbr.rel (%p1105) target = $region48
        $region47: #{tpu_custom_call.1} parent=31 // pred_region
          %1108 = vst [vmem:[%s266] sm:$0xff] %v1042
          %1109 = vst [vmem:[%s266 + $0x8] sm:$0xff] %v1045
          %1110 = vst [vmem:[%s266 + $0x10] sm:$0xff] %v1050
          %1111 = vst [vmem:[%s266 + $0x18] sm:$0xff] %v1053
          %1112 = vst [vmem:[%s266 + $0x20] sm:$0xff] %v1058
          %1113 = vst [vmem:[%s266 + $0x28] sm:$0xff] %v1061
          %1114 = vst [vmem:[%s266 + $0x30] sm:$0xff] %v1066
          %1115 = vst [vmem:[%s266 + $0x38] sm:$0xff] %v1069
          %1116 = vst [vmem:[%s266 + $0x40] sm:$0xff] %v1074
          %1117 = vst [vmem:[%s266 + $0x48] sm:$0xff] %v1077
          %1118 = vst [vmem:[%s266 + $0x50] sm:$0xff] %v1082
          %1119 = vst [vmem:[%s266 + $0x58] sm:$0xff] %v1085
          %1120 = vst [vmem:[%s266 + $0x60] sm:$0xff] %v1090
          %1121 = vst [vmem:[%s266 + $0x68] sm:$0xff] %v1093
          %1122 = vst [vmem:[%s266 + $0x70] sm:$0xff] %v1098
          %1123 = vst [vmem:[%s266 + $0x78] sm:$0xff] %v1101
        $region48: #{tpu_custom_call.1} parent=31 // pred_fallthru
          _
        %p1124 = scmp.gt.s32.totalorder %s28, 0
        // Predicated region
        $region49: #{tpu_custom_call.1} parent=31 // pred_check
          %p1125 = pneg %p1124
        $region50: #{tpu_custom_call.1} parent=31 // pred_check_branch
          %1127 = sbr.rel (%p1125) target = $region52
        $region51: #{tpu_custom_call.1} parent=31 // pred_region
          %v1128 = vld [vmem:[%s266] sm:$0xff]
          %v1129 = vld [vmem:[%s266 + $0x8] sm:$0xff]
          %v1130 = vld [vmem:[%s266 + $0x10] sm:$0xff]
          %v1131 = vld [vmem:[%s266 + $0x18] sm:$0xff]
          %v1132 = vld [vmem:[%s266 + $0x20] sm:$0xff]
          %v1133 = vld [vmem:[%s266 + $0x28] sm:$0xff]
          %v1134 = vld [vmem:[%s266 + $0x30] sm:$0xff]
          %v1135 = vld [vmem:[%s266 + $0x38] sm:$0xff]
          %v1136 = vld [vmem:[%s266 + $0x40] sm:$0xff]
          %v1137 = vld [vmem:[%s266 + $0x48] sm:$0xff]
          %v1138 = vld [vmem:[%s266 + $0x50] sm:$0xff]
          %v1139 = vld [vmem:[%s266 + $0x58] sm:$0xff]
          %v1140 = vld [vmem:[%s266 + $0x60] sm:$0xff]
          %v1141 = vld [vmem:[%s266 + $0x68] sm:$0xff]
          %v1142 = vld [vmem:[%s266 + $0x70] sm:$0xff]
          %v1143 = vld [vmem:[%s266 + $0x78] sm:$0xff]
          %v1144 = vadd.f32 %v1128, %v1042
          %v1145 = vadd.f32 %v1129, %v1045
          %v1146 = vadd.f32 %v1130, %v1050
          %v1147 = vadd.f32 %v1131, %v1053
          %v1148 = vadd.f32 %v1132, %v1058
          %v1149 = vadd.f32 %v1133, %v1061
          %v1150 = vadd.f32 %v1134, %v1066
          %v1151 = vadd.f32 %v1135, %v1069
          %v1152 = vadd.f32 %v1136, %v1074
          %v1153 = vadd.f32 %v1137, %v1077
          %v1154 = vadd.f32 %v1138, %v1082
          %v1155 = vadd.f32 %v1139, %v1085
          %v1156 = vadd.f32 %v1140, %v1090
          %v1157 = vadd.f32 %v1141, %v1093
          %v1158 = vadd.f32 %v1142, %v1098
          %v1159 = vadd.f32 %v1143, %v1101
          %1160 = vst [vmem:[%s266] sm:$0xff] %v1144
          %1161 = vst [vmem:[%s266 + $0x8] sm:$0xff] %v1145
          %1162 = vst [vmem:[%s266 + $0x10] sm:$0xff] %v1146
          %1163 = vst [vmem:[%s266 + $0x18] sm:$0xff] %v1147
          %1164 = vst [vmem:[%s266 + $0x20] sm:$0xff] %v1148
          %1165 = vst [vmem:[%s266 + $0x28] sm:$0xff] %v1149
          %1166 = vst [vmem:[%s266 + $0x30] sm:$0xff] %v1150
          %1167 = vst [vmem:[%s266 + $0x38] sm:$0xff] %v1151
          %1168 = vst [vmem:[%s266 + $0x40] sm:$0xff] %v1152
          %1169 = vst [vmem:[%s266 + $0x48] sm:$0xff] %v1153
          %1170 = vst [vmem:[%s266 + $0x50] sm:$0xff] %v1154
          %1171 = vst [vmem:[%s266 + $0x58] sm:$0xff] %v1155
          %1172 = vst [vmem:[%s266 + $0x60] sm:$0xff] %v1156
          %1173 = vst [vmem:[%s266 + $0x68] sm:$0xff] %v1157
          %1174 = vst [vmem:[%s266 + $0x70] sm:$0xff] %v1158
          %1175 = vst [vmem:[%s266 + $0x78] sm:$0xff] %v1159
        $region52: #{tpu_custom_call.1} parent=31 // pred_fallthru
          _
        %s1176 = sand.u32 %s123, 1
        %s1177 = scalar_lea.sflag [#allocation4], %s1176
        %s1178 = sand.u32 %s123, 1
        %s1179 = smul.addr %s1178, 128
        %s1180 = scalar_lea.vmem [#allocation8], %s1179
        // Predicated region
        $region53: #{tpu_custom_call.1} parent=31 // pred_check
          %p1181 = pneg %p133
        $region54: #{tpu_custom_call.1} parent=31 // pred_check_branch
          %1183 = sbr.rel (%p1181) target = $region56
        $region55: #{tpu_custom_call.1} parent=31 // pred_region
          %s1185 = ssub.s32 2048, 2048
          %1186 = vsyncadd %s1177, %s1185
          %s1187 = smul.addr %s27, 16
          %s1188 = smul.addr %s1187, 128
          %s1189 = scalar_lea.hbm %s3, %s1188
          %s1190 = sshll.u32 %s1180, 4
          %s1191 = int_to_ptr.vmem [resolvable:$true] %s1190
          %1196 = dma.vmem_to_hbm [thread:$0]  %s1191, 2048, %s1189, %s1177, 128, 128, 8
        $region56: #{tpu_custom_call.1} parent=31 // pred_fallthru
          _
      $region32: #{tpu_custom_call.1} parent=5 // pred_fallthru
        _
      %p1197 = scmp.le.s32.totalorder 2, %s18
      // Predicated region
      $region57: #{tpu_custom_call.1} parent=5 // pred_check
        %p1198 = pneg %p1197
      $region58: #{tpu_custom_call.1} parent=5 // pred_check_branch
        %1200 = sbr.rel (%p1198) target = $region60
      $region59: #{tpu_custom_call.1} parent=5 // pred_region
        %s1201 = ssub.s32 %s18, 2
        // Predicated region
        $region61: #{tpu_custom_call.1} parent=59 // pred_check
          %p1202 = pneg %p139
        $region62: #{tpu_custom_call.1} parent=59 // pred_check_branch
          %1204 = sbr.rel (%p1202) target = $region64
        $region63: #{tpu_custom_call.1} parent=59 // pred_region
          %s1205 = sand.u32 %s124, 1
          %s1206 = scalar_lea.sflag [#allocation4], %s1205
          %s1207 = sand.u32 %s124, 1
          %s1208 = smul.addr %s1207, 128
          %s1209 = scalar_lea.vmem [#allocation8], %s1208
          %1210 = dma.done %s1206, 2048
        $region64: #{tpu_custom_call.1} parent=59 // pred_fallthru
          _
      $region60: #{tpu_custom_call.1} parent=5 // pred_fallthru
        _
    $region6: #{tpu_custom_call.1} parent=1 // loop_footer
      %s22 = sadd.s32 1, %s18
    $region7: #{tpu_custom_call.1} parent=1 // loop_footer_branch
      %17 = sbr.rel target = $region3
    $region8: #{tpu_custom_call.1} parent=1 // loop_exit
      _
    %1211 = vsyncpa [#allocation3], 1
    %s1212 = scalar_lea.sflag [#allocation3], 1
    %1213 = vsyncpa %s1212, 1
    %1214 = vsyncpa [#allocation6], 1
    %s1215 = scalar_lea.sflag [#allocation6], 1
    %1216 = vsyncpa %s1215, 1
    %1217 = vsyncpa [#allocation4], 1
    %s1218 = scalar_lea.sflag [#allocation4], 1
    %1219 = vsyncpa %s1218, 1

</llo_original>
